<compile_context>
chip_gen: v7x
topology: tpu7x:2x2x1
jax: 0.10.0
libtpu: 0.0.40
codegen_flags: <defaults>
</compile_context>

<pallas_src>
import jax
import jax.numpy as jnp
from jax import lax
from jax.experimental import pallas as pl
from jax.experimental.pallas import tpu as pltpu


# 3x3 taps with the center (blind spot) dropped; this order defines both the
# in-kernel tap stacking and the wrapper-side weight packing.
TAPS = tuple((dy, dx) for dy in range(3) for dx in range(3)
             if not (dy == 1 and dx == 1))


# ---------------------------------------------------------------------------
# Kernel factory. Layout inside the kernel: rows = channels (sublanes),
# cols = pixels (lanes). Nb images are processed per grid step, concatenated
# along the lane axis.
# ---------------------------------------------------------------------------
def _make_kernel(H, W, Nb, Cin, Cout, Cmid):
    HW = H * W
    PAD = W + 1                       # leading/trailing zero pad per image
    PADLEN = HW + 2 * PAD             # == (H + 2) * W + 2

    def kernel(x_ref, w_ref, vec_ref, out_ref, out1_ref):
        # ---- unpack the two consolidated parameter blocks (static slices) ----
        w3 = w_ref[0:Cout, 0:8 * Cin]                         # (Cout, 8*Cin)
        w1 = w_ref[Cout:Cout + Cmid, 0:Cout]                  # (Cmid, Cout)
        w2 = w_ref[Cout + Cmid:2 * Cout + Cmid, 0:Cmid]       # (Cout, Cmid)
        b3 = vec_ref[0:Cout, 0:1]                             # column vectors:
        a0 = vec_ref[0:Cout, 1:2]                             # broadcast over
        b1 = vec_ref[0:Cmid, 2:3]                             # lanes directly
        a1 = vec_ref[0:Cmid, 3:4]
        b2 = vec_ref[0:Cout, 4:5]
        a2 = vec_ref[0:Cout, 5:6]

        # ---- masks zeroing the one wrap-around column per horizontal tap ----
        # padded-flat position q corresponds to image column (q - 1) mod W.
        col = (lax.broadcasted_iota(jnp.int32, (1, PADLEN), 1) + (W - 1)) % W
        keep_l = col != (W - 1)   # dx == 0 taps never legally read col W-1
        keep_r = col != 0         # dx == 2 taps never legally read col 0

        zpad = jnp.zeros((Cin, PAD), jnp.float32)

        # ---- stacked tap matrix (8*Cin, Nb*HW), built from in-VMEM slices ----
        per_image = []
        for n in range(Nb):                                   # static unroll
            xn = x_ref[n].astype(jnp.float32)                 # (Cin, HW)
            xp = jnp.concatenate([zpad, xn, zpad], axis=1)    # (Cin, PADLEN)
            xl = jnp.where(keep_l, xp, 0.0)                   # for dx == 0
            xr = jnp.where(keep_r, xp, 0.0)                   # for dx == 2
            pieces = []
            for dy, dx in TAPS:
                src = xl if dx == 0 else (xr if dx == 2 else xp)
                s = dy * W + dx                               # static offset
                pieces.append(src[:, s:s + HW])               # (Cin, HW)
            per_image.append(jnp.concatenate(pieces, axis=0))  # (8*Cin, HW)
        taps = (jnp.concatenate(per_image, axis=1)
                if Nb > 1 else per_image[0])                  # (8*Cin, Nb*HW)

        # ---- blind-spot 3x3 conv: ONE MXU matmul + bias + PReLU ----
        y = jnp.dot(w3, taps, preferred_element_type=jnp.float32) + b3
        out1 = jnp.where(y >= 0.0, y, a0 * y)                 # (Cout, Nb*HW)

        # ---- residual module: 1x1 -> PReLU -> 1x1 -> average -> PReLU ----
        r = jnp.dot(w1, out1, preferred_element_type=jnp.float32) + b1
        r = jnp.where(r >= 0.0, r, a1 * r)
        r = jnp.dot(w2, r, preferred_element_type=jnp.float32) + b2
        out = (out1 + r) * 0.5
        out = jnp.where(out >= 0.0, out, a2 * out)

        # ---- lane-dense stores, one image at a time ----
        for n in range(Nb):
            out_ref[n] = out[:, n * HW:(n + 1) * HW].astype(out_ref.dtype)
            out1_ref[n] = out1[:, n * HW:(n + 1) * HW].astype(out1_ref.dtype)

    return kernel


# ---------------------------------------------------------------------------
# Wrapper: NCHW -> flat pixels (pure reshape) -> pallas_call -> NCHW.
# ---------------------------------------------------------------------------
def new1_layer_forward(x_nchw, params, block_batch=None):
    N, Cin, H, W = x_nchw.shape
    Cout, Cmid = params["Cout"], params["Cmid"]
    assert Cin == params["Cin"], "input channel mismatch"
    HW = H * W

    if block_batch is None:
        block_batch = 2 if N % 2 == 0 else 1
    Nb = block_batch
    assert N % Nb == 0

    x_flat = x_nchw.reshape(N, Cin, HW)       # no HBM pad copy, pure reshape
    w_all, vec_all = params["w_all"], params["vec_all"]
    kernel = _make_kernel(H, W, Nb, Cin, Cout, Cmid)

    grid_spec = pltpu.PrefetchScalarGridSpec(
        num_scalar_prefetch=0,
        grid=(N // Nb,),
        in_specs=[
            pl.BlockSpec((Nb, Cin, HW), lambda b: (b, 0, 0)),
            pl.BlockSpec(w_all.shape, lambda b: (0, 0)),
            pl.BlockSpec(vec_all.shape, lambda b: (0, 0)),
        ],
        out_specs=[
            pl.BlockSpec((Nb, Cout, HW), lambda b: (b, 0, 0)),
            pl.BlockSpec((Nb, Cout, HW), lambda b: (b, 0, 0)),
        ],
    )

    out_flat, out1_flat = pl.pallas_call(
        kernel,
        out_shape=(jax.ShapeDtypeStruct((N, Cout, HW), jnp.float32),
                   jax.ShapeDtypeStruct((N, Cout, HW), jnp.float32)),
        grid_spec=grid_spec,
        compiler_params=pltpu.CompilerParams(
            dimension_semantics=("parallel",)),
    )(x_flat, w_all, vec_all)

    # (N, Cout, H*W) is already NCHW after a reshape.
    return (out_flat.reshape(N, Cout, H, W),
            out1_flat.reshape(N, Cout, H, W))


# ---------------------------------------------------------------------------
# Deterministic parameter construction (mirrors the PyTorch __init__ shapes)
# + packing into the two consolidated kernel inputs.
# ---------------------------------------------------------------------------
def make_params(key, in_ch, out_ch, mul=1):
    # activation_new1 = nn.PReLU(in_ch) is applied to the out_ch conv output.
    assert in_ch == out_ch, "New1_layer forward requires in_ch == out_ch"
    k1, k2, k3 = jax.random.split(key, 3)
    mid = out_ch * mul

    # nn.Conv2d(in_ch, out_ch, 3): weight (out_ch, in_ch, 3, 3); mask -> blind spot
    conv1_w = 0.1 * jax.random.normal(k1, (out_ch, in_ch, 3, 3), jnp.float32)
    conv1_b = 0.05 * jnp.arange(out_ch, dtype=jnp.float32)
    mask = jnp.array([[1, 1, 1], [1, 0, 1], [1, 1, 1]], jnp.float32)
    w_masked = conv1_w * mask[None, None, :, :]

    # Residual_module 1x1 convs
    w1x1_1 = 0.1 * jax.random.normal(k2, (mid, out_ch, 1, 1), jnp.float32)
    b1 = 0.01 * jnp.arange(mid, dtype=jnp.float32)
    w1x1_2 = 0.1 * jax.random.normal(k3, (out_ch, mid, 1, 1), jnp.float32)
    b2 = -0.01 * jnp.arange(out_ch, dtype=jnp.float32)

    # nn.PReLU(ch, 0) initializes alpha to 0; use small nonzero ("trained")
    # values so the negative-slope path is actually exercised by the check.
    a_new1 = 0.25 + 0.01 * jnp.arange(out_ch, dtype=jnp.float32)
    a1 = 0.20 - 0.01 * jnp.arange(mid, dtype=jnp.float32)
    a2 = 0.15 + 0.02 * jnp.arange(out_ch, dtype=jnp.float32)

    # --- conv weights packed as (Cout, 8*Cin), tap order == TAPS (center dropped)
    w3_packed = jnp.concatenate(
        [w_masked[:, :, dy, dx] for (dy, dx) in TAPS], axis=1)

    # --- consolidate the three weight matrices into one block ---
    pw = max(8 * in_ch, out_ch, mid)

    def padw(m):
        return jnp.pad(m, ((0, 0), (0, pw - m.shape[1])))

    w_all = jnp.concatenate(
        [padw(w3_packed), padw(w1x1_1[:, :, 0, 0]), padw(w1x1_2[:, :, 0, 0])],
        axis=0)                                           # (2*Cout+Cmid, pw)

    # --- consolidate biases / PReLU alphas as columns (broadcast-ready) ---
    cv = max(out_ch, mid)

    def padv(v):
        return jnp.pad(v, (0, cv - v.shape[0])).reshape(cv, 1)

    vec_all = jnp.concatenate(
        [padv(conv1_b), padv(a_new1), padv(b1), padv(a1), padv(b2), padv(a2)],
        axis=1)                                           # (max(Cout,Cmid), 6)

    params = {"w_all": w_all, "vec_all": vec_all,
              "Cin": in_ch, "Cout": out_ch, "Cmid": mid}
    raw = {"conv1_w": conv1_w, "conv1_b": conv1_b, "mask": mask,
           "w1x1_1": w1x1_1, "b1": b1, "w1x1_2": w1x1_2, "b2": b2,
           "a_new1": a_new1, "a1": a1, "a2": a2}
    return params, raw


# ---------------------------------------------------------------------------
# Pure-JAX reference (mirrors the PyTorch forward) for the correctness check.
# HIGHEST precision so the XLA convs are true-f32 like the Pallas matmuls.
# ---------------------------------------------------------------------------
def reference_forward(x_nchw, raw):
    dn = ("NCHW", "OIHW", "NCHW")
    hi = lax.Precision.HIGHEST

    def prelu(v, a):
        return jnp.where(v >= 0, v, a[None, :, None, None] * v)

    w_masked = raw["conv1_w"] * raw["mask"][None, None, :, :]
    y = lax.conv_general_dilated(x_nchw, w_masked, (1, 1), "SAME",
                                 dimension_numbers=dn, precision=hi)
    y = y + raw["conv1_b"][None, :, None, None]
    out1 = prelu(y, raw["a_new1"])

    r = lax.conv_general_dilated(out1, raw["w1x1_1"], (1, 1), "VALID",
                                 dimension_numbers=dn, precision=hi)
    r = r + raw["b1"][None, :, None, None]
    r = prelu(r, raw["a1"])
    r = lax.conv_general_dilated(r, raw["w1x1_2"], (1, 1), "VALID",
                                 dimension_numbers=dn, precision=hi)
    r = r + raw["b2"][None, :, None, None]
    out = (out1 + r) / 2.0
    out = prelu(out, raw["a2"])
    return out, out1


if __name__ == "__main__":
    key = jax.random.PRNGKey(0)
    kx, kp = jax.random.split(key)

    N, C, H, W = 2, 4, 16, 16          # in_ch == out_ch required by PReLU(in_ch)
    x = jax.random.normal(kx, (N, C, H, W), jnp.float32)
    params, raw = make_params(kp, in_ch=C, out_ch=C, mul=1)

    out, out_new1 = new1_layer_forward(x, params)
    out = jax.block_until_ready(out)
    out_new1 = jax.block_until_ready(out_new1)

    ref_out, ref_out1 = reference_forward(x, raw)
    assert out.shape == (N, C, H, W) and out_new1.shape == (N, C, H, W)
    # 5e-3 tolerance: absorbs possible MXU pass-count (f32 vs bf16-pass)
    # differences between the Pallas dot and the XLA reference conv while
    # still catching any structural/tap-indexing error (those are O(1e-1)).
    assert jnp.allclose(out_new1, ref_out1, rtol=5e-3, atol=5e-3), "output_new1 mismatch"
    assert jnp.allclose(out, ref_out, rtol=5e-3, atol=5e-3), "output mismatch"

    print("KERNEL_OK")
</pallas_src>

<mosaic_0001>
module attributes {stable_mosaic.version = 11 : i64} {
  func.func @kernel(%arg0: i32, %arg1: memref<2x4x256xf32, #tpu.memory_space<vmem>>, %arg2: memref<12x32xf32, #tpu.memory_space<vmem>>, %arg3: memref<4x6xf32, #tpu.memory_space<vmem>>, %arg4: memref<2x4x256xf32, #tpu.memory_space<vmem>>, %arg5: memref<2x4x256xf32, #tpu.memory_space<vmem>>) attributes {dimension_semantics = [#tpu.dimension_semantics<parallel>], iteration_bounds = array<i64: 1>, scalar_prefetch = 0 : i64, scratch_operands = 0 : i64, tpu.core_type = #tpu.core_type<tc>, window_params = [{transform_indices = @transform_0, window_bounds = array<i64: 2, 4, 256>}, {pipeline_mode = #tpu.pipeline_mode<synchronous>, transform_indices = @transform_1, window_bounds = array<i64: 12, 32>}, {pipeline_mode = #tpu.pipeline_mode<synchronous>, transform_indices = @transform_2, window_bounds = array<i64: 4, 6>}, {transform_indices = @transform_3, window_bounds = array<i64: 2, 4, 256>}, {transform_indices = @transform_4, window_bounds = array<i64: 2, 4, 256>}]} {
    %c0 = arith.constant 0 : index
    %c0_0 = arith.constant 0 : index
    %0 = vector.load %arg2[%c0, %c0_0] : memref<12x32xf32, #tpu.memory_space<vmem>>, vector<4x32xf32>
    %c4 = arith.constant 4 : index
    %c0_1 = arith.constant 0 : index
    %1 = vector.load %arg2[%c4, %c0_1] : memref<12x32xf32, #tpu.memory_space<vmem>>, vector<4x4xf32>
    %c8 = arith.constant 8 : index
    %c0_2 = arith.constant 0 : index
    %2 = vector.load %arg2[%c8, %c0_2] : memref<12x32xf32, #tpu.memory_space<vmem>>, vector<4x4xf32>
    %c0_3 = arith.constant 0 : index
    %c0_4 = arith.constant 0 : index
    %3 = vector.load %arg3[%c0_3, %c0_4] : memref<4x6xf32, #tpu.memory_space<vmem>>, vector<4x1xf32>
    %c0_5 = arith.constant 0 : index
    %c1 = arith.constant 1 : index
    %4 = vector.load %arg3[%c0_5, %c1] : memref<4x6xf32, #tpu.memory_space<vmem>>, vector<4x1xf32>
    %c0_6 = arith.constant 0 : index
    %c2 = arith.constant 2 : index
    %5 = vector.load %arg3[%c0_6, %c2] : memref<4x6xf32, #tpu.memory_space<vmem>>, vector<4x1xf32>
    %c0_7 = arith.constant 0 : index
    %c3 = arith.constant 3 : index
    %6 = vector.load %arg3[%c0_7, %c3] : memref<4x6xf32, #tpu.memory_space<vmem>>, vector<4x1xf32>
    %c0_8 = arith.constant 0 : index
    %c4_9 = arith.constant 4 : index
    %7 = vector.load %arg3[%c0_8, %c4_9] : memref<4x6xf32, #tpu.memory_space<vmem>>, vector<4x1xf32>
    %c0_10 = arith.constant 0 : index
    %c5 = arith.constant 5 : index
    %8 = vector.load %arg3[%c0_10, %c5] : memref<4x6xf32, #tpu.memory_space<vmem>>, vector<4x1xf32>
    %9 = tpu.iota {dimensions = array<i32: 1>} : vector<1x290xi32>
    %c15_i32 = arith.constant 15 : i32
    %10 = vector.broadcast %c15_i32 : i32 to vector<1x290xi32>
    %11 = arith.addi %9, %10 : vector<1x290xi32>
    %c16_i32 = arith.constant 16 : i32
    %c0_i32 = arith.constant 0 : i32
    %12 = arith.cmpi eq, %c16_i32, %c0_i32 : i32
    %c1_i32 = arith.constant 1 : i32
    %13 = arith.select %12, %c1_i32, %c16_i32 : i32
    %14 = vector.broadcast %13 : i32 to vector<1x290xi32>
    %15 = arith.remsi %11, %14 : vector<1x290xi32>
    %c0_i32_11 = arith.constant 0 : i32
    %16 = vector.broadcast %c0_i32_11 : i32 to vector<1x290xi32>
    %17 = arith.cmpi ne, %15, %16 : vector<1x290xi32>
    %c0_i32_12 = arith.constant 0 : i32
    %18 = vector.broadcast %c0_i32_12 : i32 to vector<1x290xi32>
    %19 = arith.cmpi slt, %15, %18 : vector<1x290xi32>
    %c0_i32_13 = arith.constant 0 : i32
    %20 = arith.cmpi slt, %13, %c0_i32_13 : i32
    %21 = vector.broadcast %20 : i1 to vector<1x290xi1>
    %22 = vector.broadcast %21 : vector<1x290xi1> to vector<1x290xi1>
    %23 = arith.xori %19, %22 : vector<1x290xi1>
    %24 = arith.andi %23, %17 : vector<1x290xi1>
    %25 = vector.broadcast %13 : i32 to vector<1x290xi32>
    %26 = arith.addi %15, %25 : vector<1x290xi32>
    %27 = arith.select %24, %26, %15 : vector<1x290xi1>, vector<1x290xi32>
    %c15_i32_14 = arith.constant 15 : i32
    %28 = vector.broadcast %c15_i32_14 : i32 to vector<1x290xi32>
    %29 = arith.cmpi ne, %27, %28 : vector<1x290xi32>
    %c0_i32_15 = arith.constant 0 : i32
    %30 = vector.broadcast %c0_i32_15 : i32 to vector<1x290xi32>
    %31 = arith.cmpi ne, %27, %30 : vector<1x290xi32>
    %cst = arith.constant 0.000000e+00 : f32
    %32 = vector.broadcast %cst : f32 to vector<4x17xf32>
    %c0_16 = arith.constant 0 : index
    %c0_17 = arith.constant 0 : index
    %c0_18 = arith.constant 0 : index
    %33 = vector.load %arg1[%c0_16, %c0_17, %c0_18] : memref<2x4x256xf32, #tpu.memory_space<vmem>>, vector<1x4x256xf32>
    %34 = vector.shape_cast %33 : vector<1x4x256xf32> to vector<4x256xf32>
    %35 = tpu.concatenate %32, %34, %32 in 1 : vector<4x17xf32>, vector<4x256xf32>, vector<4x17xf32> -> vector<4x290xf32>
    %cst_19 = arith.constant 0.000000e+00 : f32
    %36 = vector.shape_cast %29 : vector<1x290xi1> to vector<1x290xi1>
    %37 = vector.broadcast %36 : vector<1x290xi1> to vector<4x290xi1>
    %38 = vector.broadcast %cst_19 : f32 to vector<4x290xf32>
    %39 = arith.select %37, %35, %38 : vector<4x290xi1>, vector<4x290xf32>
    %cst_20 = arith.constant 0.000000e+00 : f32
    %40 = vector.shape_cast %31 : vector<1x290xi1> to vector<1x290xi1>
    %41 = vector.broadcast %40 : vector<1x290xi1> to vector<4x290xi1>
    %42 = vector.broadcast %cst_20 : f32 to vector<4x290xf32>
    %43 = arith.select %41, %35, %42 : vector<4x290xi1>, vector<4x290xf32>
    %44 = vector.extract_strided_slice %39 {offsets = [0, 0], sizes = [4, 256], strides = [1, 1]} : vector<4x290xf32> to vector<4x256xf32>
    %45 = vector.extract_strided_slice %35 {offsets = [0, 1], sizes = [4, 256], strides = [1, 1]} : vector<4x290xf32> to vector<4x256xf32>
    %46 = vector.extract_strided_slice %43 {offsets = [0, 2], sizes = [4, 256], strides = [1, 1]} : vector<4x290xf32> to vector<4x256xf32>
    %47 = vector.extract_strided_slice %39 {offsets = [0, 16], sizes = [4, 256], strides = [1, 1]} : vector<4x290xf32> to vector<4x256xf32>
    %48 = vector.extract_strided_slice %43 {offsets = [0, 18], sizes = [4, 256], strides = [1, 1]} : vector<4x290xf32> to vector<4x256xf32>
    %49 = vector.extract_strided_slice %39 {offsets = [0, 32], sizes = [4, 256], strides = [1, 1]} : vector<4x290xf32> to vector<4x256xf32>
    %50 = vector.extract_strided_slice %35 {offsets = [0, 33], sizes = [4, 256], strides = [1, 1]} : vector<4x290xf32> to vector<4x256xf32>
    %51 = vector.extract_strided_slice %43 {offsets = [0, 34], sizes = [4, 256], strides = [1, 1]} : vector<4x290xf32> to vector<4x256xf32>
    %52 = tpu.concatenate %44, %45, %46, %47, %48, %49, %50, %51 in 0 : vector<4x256xf32>, vector<4x256xf32>, vector<4x256xf32>, vector<4x256xf32>, vector<4x256xf32>, vector<4x256xf32>, vector<4x256xf32>, vector<4x256xf32> -> vector<32x256xf32>
    %c1_21 = arith.constant 1 : index
    %c0_22 = arith.constant 0 : index
    %c0_23 = arith.constant 0 : index
    %53 = vector.load %arg1[%c1_21, %c0_22, %c0_23] : memref<2x4x256xf32, #tpu.memory_space<vmem>>, vector<1x4x256xf32>
    %54 = vector.shape_cast %53 : vector<1x4x256xf32> to vector<4x256xf32>
    %55 = tpu.concatenate %32, %54, %32 in 1 : vector<4x17xf32>, vector<4x256xf32>, vector<4x17xf32> -> vector<4x290xf32>
    %cst_24 = arith.constant 0.000000e+00 : f32
    %56 = vector.shape_cast %29 : vector<1x290xi1> to vector<1x290xi1>
    %57 = vector.broadcast %56 : vector<1x290xi1> to vector<4x290xi1>
    %58 = vector.broadcast %cst_24 : f32 to vector<4x290xf32>
    %59 = arith.select %57, %55, %58 : vector<4x290xi1>, vector<4x290xf32>
    %cst_25 = arith.constant 0.000000e+00 : f32
    %60 = vector.shape_cast %31 : vector<1x290xi1> to vector<1x290xi1>
    %61 = vector.broadcast %60 : vector<1x290xi1> to vector<4x290xi1>
    %62 = vector.broadcast %cst_25 : f32 to vector<4x290xf32>
    %63 = arith.select %61, %55, %62 : vector<4x290xi1>, vector<4x290xf32>
    %64 = vector.extract_strided_slice %59 {offsets = [0, 0], sizes = [4, 256], strides = [1, 1]} : vector<4x290xf32> to vector<4x256xf32>
    %65 = vector.extract_strided_slice %55 {offsets = [0, 1], sizes = [4, 256], strides = [1, 1]} : vector<4x290xf32> to vector<4x256xf32>
    %66 = vector.extract_strided_slice %63 {offsets = [0, 2], sizes = [4, 256], strides = [1, 1]} : vector<4x290xf32> to vector<4x256xf32>
    %67 = vector.extract_strided_slice %59 {offsets = [0, 16], sizes = [4, 256], strides = [1, 1]} : vector<4x290xf32> to vector<4x256xf32>
    %68 = vector.extract_strided_slice %63 {offsets = [0, 18], sizes = [4, 256], strides = [1, 1]} : vector<4x290xf32> to vector<4x256xf32>
    %69 = vector.extract_strided_slice %59 {offsets = [0, 32], sizes = [4, 256], strides = [1, 1]} : vector<4x290xf32> to vector<4x256xf32>
    %70 = vector.extract_strided_slice %55 {offsets = [0, 33], sizes = [4, 256], strides = [1, 1]} : vector<4x290xf32> to vector<4x256xf32>
    %71 = vector.extract_strided_slice %63 {offsets = [0, 34], sizes = [4, 256], strides = [1, 1]} : vector<4x290xf32> to vector<4x256xf32>
    %72 = tpu.concatenate %64, %65, %66, %67, %68, %69, %70, %71 in 0 : vector<4x256xf32>, vector<4x256xf32>, vector<4x256xf32>, vector<4x256xf32>, vector<4x256xf32>, vector<4x256xf32>, vector<4x256xf32>, vector<4x256xf32> -> vector<32x256xf32>
    %73 = tpu.concatenate %52, %72 in 1 : vector<32x256xf32>, vector<32x256xf32> -> vector<32x512xf32>
    %cst_26 = arith.constant dense<0.000000e+00> : vector<4x512xf32>
    %74 = tpu.matmul %0, %73, %cst_26 {dimension_numbers = #tpu.dot_dimension_numbers<[1], [0], [0], [1], [0, 0, 1, 1], [], []>} : vector<4x32xf32>, vector<32x512xf32>, vector<4x512xf32> -> vector<4x512xf32>
    %75 = vector.broadcast %3 : vector<4x1xf32> to vector<4x512xf32>
    %76 = arith.addf %74, %75 : vector<4x512xf32>
    %cst_27 = arith.constant 0.000000e+00 : f32
    %77 = vector.broadcast %cst_27 : f32 to vector<4x512xf32>
    %78 = arith.cmpf oge, %76, %77 : vector<4x512xf32>
    %79 = vector.broadcast %4 : vector<4x1xf32> to vector<4x512xf32>
    %80 = arith.mulf %79, %76 : vector<4x512xf32>
    %81 = arith.select %78, %76, %80 : vector<4x512xi1>, vector<4x512xf32>
    %cst_28 = arith.constant dense<0.000000e+00> : vector<4x512xf32>
    %82 = tpu.matmul %1, %81, %cst_28 {dimension_numbers = #tpu.dot_dimension_numbers<[1], [0], [0], [1], [0, 0, 1, 1], [], []>} : vector<4x4xf32>, vector<4x512xf32>, vector<4x512xf32> -> vector<4x512xf32>
    %83 = vector.broadcast %5 : vector<4x1xf32> to vector<4x512xf32>
    %84 = arith.addf %82, %83 : vector<4x512xf32>
    %cst_29 = arith.constant 0.000000e+00 : f32
    %85 = vector.broadcast %cst_29 : f32 to vector<4x512xf32>
    %86 = arith.cmpf oge, %84, %85 : vector<4x512xf32>
    %87 = vector.broadcast %6 : vector<4x1xf32> to vector<4x512xf32>
    %88 = arith.mulf %87, %84 : vector<4x512xf32>
    %89 = arith.select %86, %84, %88 : vector<4x512xi1>, vector<4x512xf32>
    %cst_30 = arith.constant dense<0.000000e+00> : vector<4x512xf32>
    %90 = tpu.matmul %2, %89, %cst_30 {dimension_numbers = #tpu.dot_dimension_numbers<[1], [0], [0], [1], [0, 0, 1, 1], [], []>} : vector<4x4xf32>, vector<4x512xf32>, vector<4x512xf32> -> vector<4x512xf32>
    %91 = vector.broadcast %7 : vector<4x1xf32> to vector<4x512xf32>
    %92 = arith.addf %90, %91 : vector<4x512xf32>
    %93 = arith.addf %81, %92 : vector<4x512xf32>
    %cst_31 = arith.constant 5.000000e-01 : f32
    %94 = vector.broadcast %cst_31 : f32 to vector<4x512xf32>
    %95 = arith.mulf %93, %94 : vector<4x512xf32>
    %cst_32 = arith.constant 0.000000e+00 : f32
    %96 = vector.broadcast %cst_32 : f32 to vector<4x512xf32>
    %97 = arith.cmpf oge, %95, %96 : vector<4x512xf32>
    %98 = vector.broadcast %8 : vector<4x1xf32> to vector<4x512xf32>
    %99 = arith.mulf %98, %95 : vector<4x512xf32>
    %100 = arith.select %97, %95, %99 : vector<4x512xi1>, vector<4x512xf32>
    %101 = vector.extract_strided_slice %100 {offsets = [0, 0], sizes = [4, 256], strides = [1, 1]} : vector<4x512xf32> to vector<4x256xf32>
    %c0_33 = arith.constant 0 : index
    %c0_34 = arith.constant 0 : index
    %c0_35 = arith.constant 0 : index
    %102 = vector.load %arg4[%c0_33, %c0_34, %c0_35] : memref<2x4x256xf32, #tpu.memory_space<vmem>>, vector<1x4x256xf32>
    %103 = vector.shape_cast %102 : vector<1x4x256xf32> to vector<4x256xf32>
    %104 = vector.shape_cast %101 : vector<4x256xf32> to vector<1x4x256xf32>
    tpu.vector_store %arg4[%c0_33, %c0_34, %c0_35], %104 {strides = array<i32>} : memref<2x4x256xf32, #tpu.memory_space<vmem>>, vector<1x4x256xf32>,
    %105 = vector.extract_strided_slice %81 {offsets = [0, 0], sizes = [4, 256], strides = [1, 1]} : vector<4x512xf32> to vector<4x256xf32>
    %c0_36 = arith.constant 0 : index
    %c0_37 = arith.constant 0 : index
    %c0_38 = arith.constant 0 : index
    %106 = vector.load %arg5[%c0_36, %c0_37, %c0_38] : memref<2x4x256xf32, #tpu.memory_space<vmem>>, vector<1x4x256xf32>
    %107 = vector.shape_cast %106 : vector<1x4x256xf32> to vector<4x256xf32>
    %108 = vector.shape_cast %105 : vector<4x256xf32> to vector<1x4x256xf32>
    tpu.vector_store %arg5[%c0_36, %c0_37, %c0_38], %108 {strides = array<i32>} : memref<2x4x256xf32, #tpu.memory_space<vmem>>, vector<1x4x256xf32>,
    %109 = vector.extract_strided_slice %100 {offsets = [0, 256], sizes = [4, 256], strides = [1, 1]} : vector<4x512xf32> to vector<4x256xf32>
    %c1_39 = arith.constant 1 : index
    %c0_40 = arith.constant 0 : index
    %c0_41 = arith.constant 0 : index
    %110 = vector.load %arg4[%c1_39, %c0_40, %c0_41] : memref<2x4x256xf32, #tpu.memory_space<vmem>>, vector<1x4x256xf32>
    %111 = vector.shape_cast %110 : vector<1x4x256xf32> to vector<4x256xf32>
    %112 = vector.shape_cast %109 : vector<4x256xf32> to vector<1x4x256xf32>
    tpu.vector_store %arg4[%c1_39, %c0_40, %c0_41], %112 {strides = array<i32>} : memref<2x4x256xf32, #tpu.memory_space<vmem>>, vector<1x4x256xf32>,
    %113 = vector.extract_strided_slice %81 {offsets = [0, 256], sizes = [4, 256], strides = [1, 1]} : vector<4x512xf32> to vector<4x256xf32>
    %c1_42 = arith.constant 1 : index
    %c0_43 = arith.constant 0 : index
    %c0_44 = arith.constant 0 : index
    %114 = vector.load %arg5[%c1_42, %c0_43, %c0_44] : memref<2x4x256xf32, #tpu.memory_space<vmem>>, vector<1x4x256xf32>
    %115 = vector.shape_cast %114 : vector<1x4x256xf32> to vector<4x256xf32>
    %116 = vector.shape_cast %113 : vector<4x256xf32> to vector<1x4x256xf32>
    tpu.vector_store %arg5[%c1_42, %c0_43, %c0_44], %116 {strides = array<i32>} : memref<2x4x256xf32, #tpu.memory_space<vmem>>, vector<1x4x256xf32>,
    return
  }
  func.func @transform_0(%arg0: i32) -> (i32, i32, i32) {
    %c0_i32 = arith.constant 0 : i32
    %c0_i32_0 = arith.constant 0 : i32
    %c0_i32_1 = arith.constant 0 : i32
    return %arg0, %c0_i32, %c0_i32_0 : i32, i32, i32
  }
  func.func @transform_1(%arg0: i32) -> (i32, i32) {
    %c0_i32 = arith.constant 0 : i32
    %c0_i32_0 = arith.constant 0 : i32
    %c0_i32_1 = arith.constant 0 : i32
    return %c0_i32, %c0_i32_0 : i32, i32
  }
  func.func @transform_2(%arg0: i32) -> (i32, i32) {
    %c0_i32 = arith.constant 0 : i32
    %c0_i32_0 = arith.constant 0 : i32
    %c0_i32_1 = arith.constant 0 : i32
    return %c0_i32, %c0_i32_0 : i32, i32
  }
  func.func @transform_3(%arg0: i32) -> (i32, i32, i32) {
    %c0_i32 = arith.constant 0 : i32
    %c0_i32_0 = arith.constant 0 : i32
    %c0_i32_1 = arith.constant 0 : i32
    return %arg0, %c0_i32, %c0_i32_0 : i32, i32, i32
  }
  func.func @transform_4(%arg0: i32) -> (i32, i32, i32) {
    %c0_i32 = arith.constant 0 : i32
    %c0_i32_0 = arith.constant 0 : i32
    %c0_i32_1 = arith.constant 0 : i32
    return %arg0, %c0_i32, %c0_i32_0 : i32, i32, i32
  }
}

</mosaic_0001>

<llo_original>
// kernel: tpu_custom_call.1
$region0: #{tpu_custom_call.1}
  #allocation0 [shape = 'u32[]', space=smem, size = 0x4, offset = 0x4, fixed_abs, tag = 'smem constant byte address 0x4 - core index']
  #allocation1 [shape = 'u32[144,128]{1,0:T(1,128)}', space=vmem, size = 0x12000, scoped, tag = 'internal scratch']
  %s0 = inlined_call_operand.hbm [shape: f32[2,4,256], index: 0, kind: input, shape index: {}]
  %s1 = inlined_call_operand.hbm [shape: f32[12,32], index: 1, kind: input, shape index: {}]
  %s2 = inlined_call_operand.vmem [shape: f32[4,6], index: 2, kind: input, shape index: {}]
  %s3 = inlined_call_operand.hbm [shape: f32[2,4,256], index: 3, kind: output, shape index: {0}]
  %s4 = inlined_call_operand.hbm [shape: f32[2,4,256], index: 4, kind: output, shape index: {1}]
  %5 = xla_tuple %s3, %s4
  %s6 = sld [smem:[#allocation0]]
  $region38: #{tpu_custom_call.1} parent=0
    _
  %s8 = ssub.s32 1, %s6
  %s9 = scalar_select 0, %s8, %s6
  $region1: #{tpu_custom_call.1} parent=0
    #allocation2 [shape = 'u8[8192]{0}', space=vmem, size = 0x2000, scoped, tag = 'input window, operand 0, single buffered']
    #allocation3 [shape = 's32[1]{0}', space=sflag, size = 0x4, scoped, tag = 'scoped memory for tpu_custom_call.1']
    #allocation4 [shape = 's32[1]{0}', space=sflag, size = 0x4, scoped, tag = 'scoped memory for tpu_custom_call.1']
    #allocation5 [shape = 'u8[8192]{0}', space=vmem, size = 0x2000, scoped, tag = 'input window, operand 1, single buffered']
    #allocation6 [shape = 's32[1]{0}', space=sflag, size = 0x4, scoped, tag = 'scoped memory for tpu_custom_call.1']
    #allocation7 [shape = 'u8[8192]{0}', space=vmem, size = 0x2000, scoped, tag = 'output window, operand 0, single buffered']
    #allocation8 [shape = 'u8[8192]{0}', space=vmem, size = 0x2000, scoped, tag = 'output window, operand 1, single buffered']
    #allocation9 [shape = 's32[1]{0}', space=sflag, size = 0x4, scoped, tag = 'scoped memory for tpu_custom_call.1']
    %10 = vsyncpa [#allocation3], 0
    %11 = vsyncpa [#allocation6], 0
    %12 = vsyncpa [#allocation4], 0
    %13 = vsyncpa [#allocation9], 0
    // Predicated region
    $region2: #{tpu_custom_call.1} parent=1 // pred_check
      _
    $region3: #{tpu_custom_call.1} parent=1 // pred_check_branch
      %15 = sbr.rel (0) target = $region5
    $region4: #{tpu_custom_call.1} parent=1 // pred_region
      %s17 = ssub.s32 256, 256
      %18 = vsyncadd [#allocation3], %s17
      %s19 = sshll.u32 [#allocation2], 4
      %s20 = int_to_ptr.vmem [resolvable:$true] %s19
      %25 = dma.hbm_to_vmem [thread:$0]  %s0, 256, %s20, [#allocation3], 128, 128, 8
    $region5: #{tpu_custom_call.1} parent=1 // pred_fallthru
      _
    // Predicated region
    $region6: #{tpu_custom_call.1} parent=1 // pred_check
      _
    $region7: #{tpu_custom_call.1} parent=1 // pred_check_branch
      %27 = sbr.rel (0) target = $region9
    $region8: #{tpu_custom_call.1} parent=1 // pred_region
      %s29 = ssub.s32 256, 256
      %30 = vsyncadd [#allocation6], %s29
      %s31 = sshll.u32 [#allocation5], 4
      %s32 = int_to_ptr.vmem [resolvable:$true] %s31
      %37 = dma.hbm_to_vmem [thread:$0]  %s1, 256, %s32, [#allocation6], 128, 128, 8
    $region9: #{tpu_custom_call.1} parent=1 // pred_fallthru
      _
    // Predicated region
    $region10: #{tpu_custom_call.1} parent=1 // pred_check
      _
    $region11: #{tpu_custom_call.1} parent=1 // pred_check_branch
      %39 = sbr.rel (0) target = $region13
    $region12: #{tpu_custom_call.1} parent=1 // pred_region
      _
    $region13: #{tpu_custom_call.1} parent=1 // pred_fallthru
      _
    // Predicated region
    $region14: #{tpu_custom_call.1} parent=1 // pred_check
      _
    $region15: #{tpu_custom_call.1} parent=1 // pred_check_branch
      %41 = sbr.rel (0) target = $region17
    $region16: #{tpu_custom_call.1} parent=1 // pred_region
      %42 = dma.done [#allocation3], 256
    $region17: #{tpu_custom_call.1} parent=1 // pred_fallthru
      _
    // Predicated region
    $region18: #{tpu_custom_call.1} parent=1 // pred_check
      _
    $region19: #{tpu_custom_call.1} parent=1 // pred_check_branch
      %44 = sbr.rel (0) target = $region21
    $region20: #{tpu_custom_call.1} parent=1 // pred_region
      %45 = dma.done [#allocation6], 256
    $region21: #{tpu_custom_call.1} parent=1 // pred_fallthru
      _
    %v46 = vld [vmem:[#allocation5] sm:$0xf]
    %v47 = vld [vmem:[#allocation5 + $0x4] sm:$0xf]
    %v48 = vld [vmem:[#allocation5 + $0x8] sm:$0xf]
    %v49 = vld [vmem:[%s2] sm:$0xf]
    %v50 = vlaneseq
    %v51 = vand.u32 %v50, 127
    %v52 = vadd.s32 %v51, 128
    %v53 = vadd.s32 %v51, 256
    %v54 = vadd.s32 %v51, 15
    %v55 = vadd.s32 %v52, 15
    %v56 = vadd.s32 %v53, 15
    %vm57 = vcmp.lt.s32.totalorder %v54, 0
    %v58 = vsub.s32 0, %v54
    %v59 = vsel %vm57, %v58, %v54
    %v60 = vshrl.u32 %v59, 4
    %v61 = vand.u32 %v59, 15
    %v62 = vsub.s32 0, %v61
    %v63 = vsel %vm57, %v62, %v61
    %vm64 = vcmp.lt.s32.totalorder %v55, 0
    %v65 = vsub.s32 0, %v55
    %v66 = vsel %vm64, %v65, %v55
    %v67 = vshrl.u32 %v66, 4
    %v68 = vand.u32 %v66, 15
    %v69 = vsub.s32 0, %v68
    %v70 = vsel %vm64, %v69, %v68
    %vm71 = vcmp.lt.s32.totalorder %v56, 0
    %v72 = vsub.s32 0, %v56
    %v73 = vsel %vm71, %v72, %v56
    %v74 = vshrl.u32 %v73, 4
    %v75 = vand.u32 %v73, 15
    %v76 = vsub.s32 0, %v75
    %v77 = vsel %vm71, %v76, %v75
    %vm78 = vcmp.ne.s32.totalorder %v63, 0
    %vm79 = vcmp.ne.s32.totalorder %v70, 0
    %vm80 = vcmp.ne.s32.totalorder %v77, 0
    %vm81 = vcmp.lt.s32.totalorder %v63, 0
    %vm82 = vcmp.lt.s32.totalorder %v70, 0
    %vm83 = vcmp.lt.s32.totalorder %v77, 0
    %vm84 = vmand %vm81, %vm78
    %vm85 = vmand %vm82, %vm79
    %vm86 = vmand %vm83, %vm80
    %v87 = vadd.s32 %v63, 16
    %v88 = vadd.s32 %v70, 16
    %v89 = vadd.s32 %v77, 16
    %v90 = vsel %vm84, %v87, %v63
    %v91 = vsel %vm85, %v88, %v70
    %v92 = vsel %vm86, %v89, %v77
    %vm93 = vcmp.ne.s32.totalorder %v90, 15
    %vm94 = vcmp.ne.s32.totalorder %v91, 15
    %vm95 = vcmp.ne.s32.totalorder %v92, 15
    %vm96 = vcmp.ne.s32.totalorder %v90, 0
    %vm97 = vcmp.ne.s32.totalorder %v91, 0
    %vm98 = vcmp.ne.s32.totalorder %v92, 0
    %v99 = vld [vmem:[#allocation2] sm:$0xff]
    %v101 = vcombine.high %v99, %v99
    %102 = vrot.lane.b32.xlu0 %v99, 17
    %v103 = vpop.permute.xlu0 %102
    %104 = vrot.lane.b32.xlu0 %v101, 17
    %v105 = vpop.permute.xlu0 %104
    %vm106 = vcmask 138240
    %v107 = vsel %vm106, %v103, %v105
    %v111 = vsel %vm106, 0.0, %v103
    %v112 = vsel %vm106, %v105, 0.0
    %v113 = vsel %vm93, 1, 0
    %v114 = vsel %vm94, 1, 0
    %v115 = vsel %vm95, 1, 0
    %vm116 = vcmp.eq.s32.totalorder %v113, 1
    %vm117 = vcmp.eq.s32.totalorder %v114, 1
    %vm118 = vcmp.eq.s32.totalorder %v115, 1
    %v119 = vsel %vm116, %v111, 0.0
    %v120 = vsel %vm117, %v107, 0.0
    %v121 = vsel %vm118, %v112, 0.0
    %v122 = vsel %vm96, 1, 0
    %v123 = vsel %vm97, 1, 0
    %v124 = vsel %vm98, 1, 0
    %vm125 = vcmp.eq.s32.totalorder %v122, 1
    %vm126 = vcmp.eq.s32.totalorder %v123, 1
    %vm127 = vcmp.eq.s32.totalorder %v124, 1
    %v128 = vsel %vm125, %v111, 0.0
    %v129 = vsel %vm126, %v107, 0.0
    %v130 = vsel %vm127, %v112, 0.0
    %v133 = vrot.slane %v111, 4
    %v134 = vrot.slane %v107, 4
    %v135 = vrot.slane %v112, 4
    %136 = vrot.lane.b32.xlu0 %v133, 127
    %v137 = vpop.permute.xlu0 %136
    %138 = vrot.lane.b32.xlu0 %v134, 127
    %v139 = vpop.permute.xlu0 %138
    %140 = vrot.lane.b32.xlu0 %v135, 127
    %v141 = vpop.permute.xlu0 %140
    %vm142 = vcmask 1039360
    %v143 = vsel %vm142, %v137, %v139
    %v144 = vsel %vm142, %v139, %v141
    %150 = vrot.lane.b32.xlu0 %v128, 126
    %v151 = vpop.permute.xlu0 %150
    %152 = vrot.lane.b32.xlu0 %v129, 126
    %v153 = vpop.permute.xlu0 %152
    %154 = vrot.lane.b32.xlu0 %v130, 126
    %v155 = vpop.permute.xlu0 %154
    %vm156 = vcmask 1031168
    %v157 = vsel %vm156, %v151, %v153
    %v158 = vsel %vm156, %v153, %v155
    %v164 = vrot.slane %v119, 4
    %v165 = vrot.slane %v120, 4
    %v166 = vrot.slane %v121, 4
    %167 = vrot.lane.b32.xlu0 %v164, 112
    %v168 = vpop.permute.xlu0 %167
    %169 = vrot.lane.b32.xlu0 %v165, 112
    %v170 = vpop.permute.xlu0 %169
    %171 = vrot.lane.b32.xlu0 %v166, 112
    %v172 = vpop.permute.xlu0 %171
    %vm173 = vcmask 916480
    %v174 = vsel %vm173, %v168, %v170
    %v175 = vsel %vm173, %v170, %v172
    %178 = vrot.lane.b32.xlu0 %v128, 110
    %v179 = vpop.permute.xlu0 %178
    %180 = vrot.lane.b32.xlu0 %v129, 110
    %v181 = vpop.permute.xlu0 %180
    %182 = vrot.lane.b32.xlu0 %v130, 110
    %v183 = vpop.permute.xlu0 %182
    %vm184 = vcmask 900096
    %v185 = vsel %vm184, %v179, %v181
    %v186 = vsel %vm184, %v181, %v183
    %189 = vrot.lane.b32.xlu0 %v164, 96
    %v190 = vpop.permute.xlu0 %189
    %191 = vrot.lane.b32.xlu0 %v165, 96
    %v192 = vpop.permute.xlu0 %191
    %193 = vrot.lane.b32.xlu0 %v166, 96
    %v194 = vpop.permute.xlu0 %193
    %vm195 = vcmask 785408
    %v196 = vsel %vm195, %v190, %v192
    %v197 = vsel %vm195, %v192, %v194
    %200 = vrot.lane.b32.xlu0 %v111, 95
    %v201 = vpop.permute.xlu0 %200
    %202 = vrot.lane.b32.xlu0 %v107, 95
    %v203 = vpop.permute.xlu0 %202
    %204 = vrot.lane.b32.xlu0 %v112, 95
    %v205 = vpop.permute.xlu0 %204
    %vm206 = vcmask 777216
    %v207 = vsel %vm206, %v201, %v203
    %v208 = vsel %vm206, %v203, %v205
    %v211 = vrot.slane %v128, 4
    %v212 = vrot.slane %v129, 4
    %v213 = vrot.slane %v130, 4
    %214 = vrot.lane.b32.xlu0 %v211, 94
    %v215 = vpop.permute.xlu0 %214
    %216 = vrot.lane.b32.xlu0 %v212, 94
    %v217 = vpop.permute.xlu0 %216
    %218 = vrot.lane.b32.xlu0 %v213, 94
    %v219 = vpop.permute.xlu0 %218
    %vm220 = vcmask 769024
    %v221 = vsel %vm220, %v215, %v217
    %v222 = vsel %vm220, %v217, %v219
    %vm225 = vcmask 1043456
    %v226 = vsel %vm225, %v119, %v143
    %v227 = vsel %vm225, %v120, %v144
    %v228 = vsel %vm225, %v157, %v174
    %v229 = vsel %vm225, %v158, %v175
    %v230 = vsel %vm225, %v185, %v196
    %v231 = vsel %vm225, %v186, %v197
    %v232 = vsel %vm225, %v207, %v221
    %v233 = vsel %vm225, %v208, %v222
    %s234 = scalar_lea.vmem [#allocation2], 8
    %v235 = vld [vmem:[%s234] sm:$0xff]
    %v237 = vcombine.high %v235, %v235
    %238 = vrot.lane.b32.xlu0 %v235, 17
    %v239 = vpop.permute.xlu0 %238
    %240 = vrot.lane.b32.xlu0 %v237, 17
    %v241 = vpop.permute.xlu0 %240
    %v242 = vsel %vm106, %v239, %v241
    %v246 = vsel %vm106, 0.0, %v239
    %v247 = vsel %vm106, %v241, 0.0
    %v248 = vsel %vm116, %v246, 0.0
    %v249 = vsel %vm117, %v242, 0.0
    %v250 = vsel %vm118, %v247, 0.0
    %v251 = vsel %vm125, %v246, 0.0
    %v252 = vsel %vm126, %v242, 0.0
    %v253 = vsel %vm127, %v247, 0.0
    %v256 = vrot.slane %v246, 4
    %v257 = vrot.slane %v242, 4
    %v258 = vrot.slane %v247, 4
    %259 = vrot.lane.b32.xlu0 %v256, 127
    %v260 = vpop.permute.xlu0 %259
    %261 = vrot.lane.b32.xlu0 %v257, 127
    %v262 = vpop.permute.xlu0 %261
    %263 = vrot.lane.b32.xlu0 %v258, 127
    %v264 = vpop.permute.xlu0 %263
    %v265 = vsel %vm142, %v260, %v262
    %v266 = vsel %vm142, %v262, %v264
    %272 = vrot.lane.b32.xlu0 %v251, 126
    %v273 = vpop.permute.xlu0 %272
    %274 = vrot.lane.b32.xlu0 %v252, 126
    %v275 = vpop.permute.xlu0 %274
    %276 = vrot.lane.b32.xlu0 %v253, 126
    %v277 = vpop.permute.xlu0 %276
    %v278 = vsel %vm156, %v273, %v275
    %v279 = vsel %vm156, %v275, %v277
    %v285 = vrot.slane %v248, 4
    %v286 = vrot.slane %v249, 4
    %v287 = vrot.slane %v250, 4
    %288 = vrot.lane.b32.xlu0 %v285, 112
    %v289 = vpop.permute.xlu0 %288
    %290 = vrot.lane.b32.xlu0 %v286, 112
    %v291 = vpop.permute.xlu0 %290
    %292 = vrot.lane.b32.xlu0 %v287, 112
    %v293 = vpop.permute.xlu0 %292
    %v294 = vsel %vm173, %v289, %v291
    %v295 = vsel %vm173, %v291, %v293
    %298 = vrot.lane.b32.xlu0 %v251, 110
    %v299 = vpop.permute.xlu0 %298
    %300 = vrot.lane.b32.xlu0 %v252, 110
    %v301 = vpop.permute.xlu0 %300
    %302 = vrot.lane.b32.xlu0 %v253, 110
    %v303 = vpop.permute.xlu0 %302
    %v304 = vsel %vm184, %v299, %v301
    %v305 = vsel %vm184, %v301, %v303
    %308 = vrot.lane.b32.xlu0 %v285, 96
    %v309 = vpop.permute.xlu0 %308
    %310 = vrot.lane.b32.xlu0 %v286, 96
    %v311 = vpop.permute.xlu0 %310
    %312 = vrot.lane.b32.xlu0 %v287, 96
    %v313 = vpop.permute.xlu0 %312
    %v314 = vsel %vm195, %v309, %v311
    %v315 = vsel %vm195, %v311, %v313
    %318 = vrot.lane.b32.xlu0 %v246, 95
    %v319 = vpop.permute.xlu0 %318
    %320 = vrot.lane.b32.xlu0 %v242, 95
    %v321 = vpop.permute.xlu0 %320
    %322 = vrot.lane.b32.xlu0 %v247, 95
    %v323 = vpop.permute.xlu0 %322
    %v324 = vsel %vm206, %v319, %v321
    %v325 = vsel %vm206, %v321, %v323
    %v328 = vrot.slane %v251, 4
    %v329 = vrot.slane %v252, 4
    %v330 = vrot.slane %v253, 4
    %331 = vrot.lane.b32.xlu0 %v328, 94
    %v332 = vpop.permute.xlu0 %331
    %333 = vrot.lane.b32.xlu0 %v329, 94
    %v334 = vpop.permute.xlu0 %333
    %335 = vrot.lane.b32.xlu0 %v330, 94
    %v336 = vpop.permute.xlu0 %335
    %v337 = vsel %vm220, %v332, %v334
    %v338 = vsel %vm220, %v334, %v336
    %v341 = vsel %vm225, %v248, %v265
    %v342 = vsel %vm225, %v249, %v266
    %v343 = vsel %vm225, %v278, %v294
    %v344 = vsel %vm225, %v279, %v295
    %v345 = vsel %vm225, %v304, %v314
    %v346 = vsel %vm225, %v305, %v315
    %v347 = vsel %vm225, %v324, %v337
    %v348 = vsel %vm225, %v325, %v338
    %350 = vset.pattern.permute.xlu0 0
    %351 = vperm.xlu0 %350, %v49
    %v352 = vpop.permute.xlu0 %351
    %vm354 = vcmask 261120
    %v356 = vsel %vm354, %v46, 0
    %358 = vmatprep.subr.mxu0 %v227
    %359 = vmatpush1.msra.mxu0 %v226
    %360 = vmatprep.subr.mxu0 %v229
    %361 = vmatpush1.msra.mxu0 %v228
    %362 = vmatprep.subr.mxu0 %v231
    %363 = vmatpush1.msra.mxu0 %v230
    %364 = vmatprep.subr.mxu0 %v233
    %365 = vmatpush1.msra.mxu0 %v232
    %366 = vmatprep.subr.mxu0 0.0
    %367 = vmatpush1.msra.mxu0 0.0
    %368 = vmatprep.subr.mxu0 0.0
    %369 = vmatpush1.msra.mxu0 0.0
    %370 = vmatprep.subr.mxu0 0.0
    %371 = vmatpush1.msra.mxu0 0.0
    %372 = vmatprep.subr.mxu0 0.0
    %373 = vmatpush1.msra.mxu0 0.0
    %374 = vmatprep.subr.mxu0 0.0
    %375 = vmatpush1.msra.mxu0 0.0
    %376 = vmatprep.subr.mxu0 0.0
    %377 = vmatpush1.msra.mxu0 0.0
    %378 = vmatprep.subr.mxu0 0.0
    %379 = vmatpush1.msra.mxu0 0.0
    %380 = vmatprep.subr.mxu0 0.0
    %381 = vmatpush1.msra.mxu0 0.0
    %382 = vmatprep.subr.mxu0 0.0
    %383 = vmatpush1.msra.mxu0 0.0
    %384 = vmatprep.subr.mxu0 0.0
    %385 = vmatpush1.msra.mxu0 0.0
    %386 = vmatprep.subr.mxu0 0.0
    %387 = vmatpush1.msra.mxu0 0.0
    %388 = vmatprep.subr.mxu0 0.0
    %389 = vmatpush1.msra.mxu0 0.0
    %390 = vmatprep.subr.mxu0 0.0
    %391 = vmatpush1.msra.mxu0 0.0
    %392 = vmatprep.subr.mxu0 0.0
    %393 = vmatpush1.msra.mxu0 0.0
    %394 = vmatprep.subr.mxu0 0.0
    %395 = vmatpush1.msra.mxu0 0.0
    %396 = vmatprep.subr.mxu0 0.0
    %397 = vmatpush1.msra.mxu0 0.0
    %398 = vmatprep.subr.mxu0 0.0
    %399 = vmatpush1.msra.mxu0 0.0
    %400 = vmatprep.subr.mxu0 0.0
    %401 = vmatpush1.msra.mxu0 0.0
    %402 = vmatprep.subr.mxu0 0.0
    %403 = vmatpush1.msra.mxu0 0.0
    %404 = vmatprep.subr.mxu0 0.0
    %405 = vmatpush1.msra.mxu0 0.0
    %406 = vmatprep.subr.mxu0 0.0
    %407 = vmatpush1.msra.mxu0 0.0
    %408 = vmatprep.subr.mxu0 0.0
    %409 = vmatpush1.msra.mxu0 0.0
    %410 = vmatprep.subr.mxu0 0.0
    %411 = vmatpush1.msra.mxu0 0.0
    %412 = vmatprep.subr.mxu0 0.0
    %413 = vmatpush1.msra.mxu0 0.0
    %414 = vmatprep.subr.mxu0 0.0
    %415 = vmatpush1.msra.mxu0 0.0
    %416 = vmatprep.subr.mxu0 0.0
    %417 = vmatpush1.msra.mxu0 0.0
    %418 = vmatprep.subr.mxu0 0.0
    %419 = vmatpush1.msra.mxu0 0.0
    %420 = vmatprep.subr.mxu0 0.0
    %421 = vmatpush1.msra.mxu0 0.0
    %422 = vmatprep.mubr.f32.mxu0 0.0
    %423 = vmatmul.mubr.f32.gmra.mrb[0].mxu0 %v356
    %v424 = vpop.f32.mrb[0].mxu0
    %v425 = vadd.f32 %v352, %v424
    %v426 = vpop.f32.mrb[0].mxu0
    %v427 = vadd.f32 %v352, %v426
    %428 = vdwg.mxu0
    %429 = vmatprep.subr.mxu0 %v342
    %430 = vmatpush1.msra.mxu0 %v341
    %431 = vmatprep.subr.mxu0 %v344
    %432 = vmatpush1.msra.mxu0 %v343
    %433 = vmatprep.subr.mxu0 %v346
    %434 = vmatpush1.msra.mxu0 %v345
    %435 = vmatprep.subr.mxu0 %v348
    %436 = vmatpush1.msra.mxu0 %v347
    %437 = vmatprep.subr.mxu0 0.0
    %438 = vmatpush1.msra.mxu0 0.0
    %439 = vmatprep.subr.mxu0 0.0
    %440 = vmatpush1.msra.mxu0 0.0
    %441 = vmatprep.subr.mxu0 0.0
    %442 = vmatpush1.msra.mxu0 0.0
    %443 = vmatprep.subr.mxu0 0.0
    %444 = vmatpush1.msra.mxu0 0.0
    %445 = vmatprep.subr.mxu0 0.0
    %446 = vmatpush1.msra.mxu0 0.0
    %447 = vmatprep.subr.mxu0 0.0
    %448 = vmatpush1.msra.mxu0 0.0
    %449 = vmatprep.subr.mxu0 0.0
    %450 = vmatpush1.msra.mxu0 0.0
    %451 = vmatprep.subr.mxu0 0.0
    %452 = vmatpush1.msra.mxu0 0.0
    %453 = vmatprep.subr.mxu0 0.0
    %454 = vmatpush1.msra.mxu0 0.0
    %455 = vmatprep.subr.mxu0 0.0
    %456 = vmatpush1.msra.mxu0 0.0
    %457 = vmatprep.subr.mxu0 0.0
    %458 = vmatpush1.msra.mxu0 0.0
    %459 = vmatprep.subr.mxu0 0.0
    %460 = vmatpush1.msra.mxu0 0.0
    %461 = vmatprep.subr.mxu0 0.0
    %462 = vmatpush1.msra.mxu0 0.0
    %463 = vmatprep.subr.mxu0 0.0
    %464 = vmatpush1.msra.mxu0 0.0
    %465 = vmatprep.subr.mxu0 0.0
    %466 = vmatpush1.msra.mxu0 0.0
    %467 = vmatprep.subr.mxu0 0.0
    %468 = vmatpush1.msra.mxu0 0.0
    %469 = vmatprep.subr.mxu0 0.0
    %470 = vmatpush1.msra.mxu0 0.0
    %471 = vmatprep.subr.mxu0 0.0
    %472 = vmatpush1.msra.mxu0 0.0
    %473 = vmatprep.subr.mxu0 0.0
    %474 = vmatpush1.msra.mxu0 0.0
    %475 = vmatprep.subr.mxu0 0.0
    %476 = vmatpush1.msra.mxu0 0.0
    %477 = vmatprep.subr.mxu0 0.0
    %478 = vmatpush1.msra.mxu0 0.0
    %479 = vmatprep.subr.mxu0 0.0
    %480 = vmatpush1.msra.mxu0 0.0
    %481 = vmatprep.subr.mxu0 0.0
    %482 = vmatpush1.msra.mxu0 0.0
    %483 = vmatprep.subr.mxu0 0.0
    %484 = vmatpush1.msra.mxu0 0.0
    %485 = vmatprep.subr.mxu0 0.0
    %486 = vmatpush1.msra.mxu0 0.0
    %487 = vmatprep.subr.mxu0 0.0
    %488 = vmatpush1.msra.mxu0 0.0
    %489 = vmatprep.subr.mxu0 0.0
    %490 = vmatpush1.msra.mxu0 0.0
    %491 = vmatprep.subr.mxu0 0.0
    %492 = vmatpush1.msra.mxu0 0.0
    %493 = vmatprep.mubr.f32.mxu0 0.0
    %494 = vmatmul.mubr.f32.gmra.mrb[0].mxu0 %v356
    %v495 = vpop.f32.mrb[0].mxu0
    %v496 = vadd.f32 %v352, %v495
    %v497 = vpop.f32.mrb[0].mxu0
    %v498 = vadd.f32 %v352, %v497
    %499 = vdwg.mxu0
    %vm500 = vcmp.ge.f32.partialorder %v425, 0.0
    %vm501 = vcmp.ge.f32.partialorder %v427, 0.0
    %vm502 = vcmp.ge.f32.partialorder %v496, 0.0
    %vm503 = vcmp.ge.f32.partialorder %v498, 0.0
    %504 = vset.pattern.permute.xlu0 1
    %505 = vperm.xlu0 %504, %v49
    %v506 = vpop.permute.xlu0 %505
    %v508 = vmul.f32 %v506, %v425
    %v509 = vmul.f32 %v506, %v427
    %v510 = vmul.f32 %v506, %v496
    %v511 = vmul.f32 %v506, %v498
    %v512 = vsel %vm500, %v425, %v508
    %v513 = vsel %vm501, %v427, %v509
    %v514 = vsel %vm502, %v496, %v510
    %v515 = vsel %vm503, %v498, %v511
    %516 = vset.pattern.permute.xlu0 2
    %517 = vperm.xlu0 %516, %v49
    %v518 = vpop.permute.xlu0 %517
    %vm520 = vcmask 31744
    %v522 = vsel %vm520, %v47, 0
    %v525 = vsel %vm225, %v512, 0
    %v528 = vsel %vm225, %v513, 0
    %v531 = vsel %vm225, %v514, 0
    %v534 = vsel %vm225, %v515, 0
    %536 = vmatprep.subr.mxu0 %v528
    %537 = vmatpush1.msra.mxu0 %v525
    %538 = vmatprep.subr.mxu0 0.0
    %539 = vmatpush1.msra.mxu0 0.0
    %540 = vmatprep.subr.mxu0 0.0
    %541 = vmatpush1.msra.mxu0 0.0
    %542 = vmatprep.subr.mxu0 0.0
    %543 = vmatpush1.msra.mxu0 0.0
    %544 = vmatprep.subr.mxu0 0.0
    %545 = vmatpush1.msra.mxu0 0.0
    %546 = vmatprep.subr.mxu0 0.0
    %547 = vmatpush1.msra.mxu0 0.0
    %548 = vmatprep.subr.mxu0 0.0
    %549 = vmatpush1.msra.mxu0 0.0
    %550 = vmatprep.subr.mxu0 0.0
    %551 = vmatpush1.msra.mxu0 0.0
    %552 = vmatprep.subr.mxu0 0.0
    %553 = vmatpush1.msra.mxu0 0.0
    %554 = vmatprep.subr.mxu0 0.0
    %555 = vmatpush1.msra.mxu0 0.0
    %556 = vmatprep.subr.mxu0 0.0
    %557 = vmatpush1.msra.mxu0 0.0
    %558 = vmatprep.subr.mxu0 0.0
    %559 = vmatpush1.msra.mxu0 0.0
    %560 = vmatprep.subr.mxu0 0.0
    %561 = vmatpush1.msra.mxu0 0.0
    %562 = vmatprep.subr.mxu0 0.0
    %563 = vmatpush1.msra.mxu0 0.0
    %564 = vmatprep.subr.mxu0 0.0
    %565 = vmatpush1.msra.mxu0 0.0
    %566 = vmatprep.subr.mxu0 0.0
    %567 = vmatpush1.msra.mxu0 0.0
    %568 = vmatprep.subr.mxu0 0.0
    %569 = vmatpush1.msra.mxu0 0.0
    %570 = vmatprep.subr.mxu0 0.0
    %571 = vmatpush1.msra.mxu0 0.0
    %572 = vmatprep.subr.mxu0 0.0
    %573 = vmatpush1.msra.mxu0 0.0
    %574 = vmatprep.subr.mxu0 0.0
    %575 = vmatpush1.msra.mxu0 0.0
    %576 = vmatprep.subr.mxu0 0.0
    %577 = vmatpush1.msra.mxu0 0.0
    %578 = vmatprep.subr.mxu0 0.0
    %579 = vmatpush1.msra.mxu0 0.0
    %580 = vmatprep.subr.mxu0 0.0
    %581 = vmatpush1.msra.mxu0 0.0
    %582 = vmatprep.subr.mxu0 0.0
    %583 = vmatpush1.msra.mxu0 0.0
    %584 = vmatprep.subr.mxu0 0.0
    %585 = vmatpush1.msra.mxu0 0.0
    %586 = vmatprep.subr.mxu0 0.0
    %587 = vmatpush1.msra.mxu0 0.0
    %588 = vmatprep.subr.mxu0 0.0
    %589 = vmatpush1.msra.mxu0 0.0
    %590 = vmatprep.subr.mxu0 0.0
    %591 = vmatpush1.msra.mxu0 0.0
    %592 = vmatprep.subr.mxu0 0.0
    %593 = vmatpush1.msra.mxu0 0.0
    %594 = vmatprep.subr.mxu0 0.0
    %595 = vmatpush1.msra.mxu0 0.0
    %596 = vmatprep.subr.mxu0 0.0
    %597 = vmatpush1.msra.mxu0 0.0
    %598 = vmatprep.subr.mxu0 0.0
    %599 = vmatpush1.msra.mxu0 0.0
    %600 = vmatprep.mubr.f32.mxu0 0.0
    %601 = vmatmul.mubr.f32.gmra.mrb[0].mxu0 %v522
    %v602 = vpop.f32.mrb[0].mxu0
    %v603 = vadd.f32 %v518, %v602
    %v604 = vpop.f32.mrb[0].mxu0
    %v605 = vadd.f32 %v518, %v604
    %606 = vdwg.mxu0
    %607 = vmatprep.subr.mxu0 %v534
    %608 = vmatpush1.msra.mxu0 %v531
    %609 = vmatprep.subr.mxu0 0.0
    %610 = vmatpush1.msra.mxu0 0.0
    %611 = vmatprep.subr.mxu0 0.0
    %612 = vmatpush1.msra.mxu0 0.0
    %613 = vmatprep.subr.mxu0 0.0
    %614 = vmatpush1.msra.mxu0 0.0
    %615 = vmatprep.subr.mxu0 0.0
    %616 = vmatpush1.msra.mxu0 0.0
    %617 = vmatprep.subr.mxu0 0.0
    %618 = vmatpush1.msra.mxu0 0.0
    %619 = vmatprep.subr.mxu0 0.0
    %620 = vmatpush1.msra.mxu0 0.0
    %621 = vmatprep.subr.mxu0 0.0
    %622 = vmatpush1.msra.mxu0 0.0
    %623 = vmatprep.subr.mxu0 0.0
    %624 = vmatpush1.msra.mxu0 0.0
    %625 = vmatprep.subr.mxu0 0.0
    %626 = vmatpush1.msra.mxu0 0.0
    %627 = vmatprep.subr.mxu0 0.0
    %628 = vmatpush1.msra.mxu0 0.0
    %629 = vmatprep.subr.mxu0 0.0
    %630 = vmatpush1.msra.mxu0 0.0
    %631 = vmatprep.subr.mxu0 0.0
    %632 = vmatpush1.msra.mxu0 0.0
    %633 = vmatprep.subr.mxu0 0.0
    %634 = vmatpush1.msra.mxu0 0.0
    %635 = vmatprep.subr.mxu0 0.0
    %636 = vmatpush1.msra.mxu0 0.0
    %637 = vmatprep.subr.mxu0 0.0
    %638 = vmatpush1.msra.mxu0 0.0
    %639 = vmatprep.subr.mxu0 0.0
    %640 = vmatpush1.msra.mxu0 0.0
    %641 = vmatprep.subr.mxu0 0.0
    %642 = vmatpush1.msra.mxu0 0.0
    %643 = vmatprep.subr.mxu0 0.0
    %644 = vmatpush1.msra.mxu0 0.0
    %645 = vmatprep.subr.mxu0 0.0
    %646 = vmatpush1.msra.mxu0 0.0
    %647 = vmatprep.subr.mxu0 0.0
    %648 = vmatpush1.msra.mxu0 0.0
    %649 = vmatprep.subr.mxu0 0.0
    %650 = vmatpush1.msra.mxu0 0.0
    %651 = vmatprep.subr.mxu0 0.0
    %652 = vmatpush1.msra.mxu0 0.0
    %653 = vmatprep.subr.mxu0 0.0
    %654 = vmatpush1.msra.mxu0 0.0
    %655 = vmatprep.subr.mxu0 0.0
    %656 = vmatpush1.msra.mxu0 0.0
    %657 = vmatprep.subr.mxu0 0.0
    %658 = vmatpush1.msra.mxu0 0.0
    %659 = vmatprep.subr.mxu0 0.0
    %660 = vmatpush1.msra.mxu0 0.0
    %661 = vmatprep.subr.mxu0 0.0
    %662 = vmatpush1.msra.mxu0 0.0
    %663 = vmatprep.subr.mxu0 0.0
    %664 = vmatpush1.msra.mxu0 0.0
    %665 = vmatprep.subr.mxu0 0.0
    %666 = vmatpush1.msra.mxu0 0.0
    %667 = vmatprep.subr.mxu0 0.0
    %668 = vmatpush1.msra.mxu0 0.0
    %669 = vmatprep.subr.mxu0 0.0
    %670 = vmatpush1.msra.mxu0 0.0
    %671 = vmatprep.mubr.f32.mxu0 0.0
    %672 = vmatmul.mubr.f32.gmra.mrb[0].mxu0 %v522
    %v673 = vpop.f32.mrb[0].mxu0
    %v674 = vadd.f32 %v518, %v673
    %v675 = vpop.f32.mrb[0].mxu0
    %v676 = vadd.f32 %v518, %v675
    %677 = vdwg.mxu0
    %vm678 = vcmp.ge.f32.partialorder %v603, 0.0
    %vm679 = vcmp.ge.f32.partialorder %v605, 0.0
    %vm680 = vcmp.ge.f32.partialorder %v674, 0.0
    %vm681 = vcmp.ge.f32.partialorder %v676, 0.0
    %682 = vset.pattern.permute.xlu0 3
    %683 = vperm.xlu0 %682, %v49
    %v684 = vpop.permute.xlu0 %683
    %v686 = vmul.f32 %v684, %v603
    %v687 = vmul.f32 %v684, %v605
    %v688 = vmul.f32 %v684, %v674
    %v689 = vmul.f32 %v684, %v676
    %v690 = vsel %vm678, %v603, %v686
    %v691 = vsel %vm679, %v605, %v687
    %v692 = vsel %vm680, %v674, %v688
    %v693 = vsel %vm681, %v676, %v689
    %694 = vset.pattern.permute.xlu0 4
    %695 = vperm.xlu0 %694, %v49
    %v696 = vpop.permute.xlu0 %695
    %v699 = vsel %vm520, %v48, 0
    %v702 = vsel %vm225, %v690, 0
    %v705 = vsel %vm225, %v691, 0
    %v708 = vsel %vm225, %v692, 0
    %v711 = vsel %vm225, %v693, 0
    %713 = vmatprep.subr.mxu0 %v705
    %714 = vmatpush1.msra.mxu0 %v702
    %715 = vmatprep.subr.mxu0 0.0
    %716 = vmatpush1.msra.mxu0 0.0
    %717 = vmatprep.subr.mxu0 0.0
    %718 = vmatpush1.msra.mxu0 0.0
    %719 = vmatprep.subr.mxu0 0.0
    %720 = vmatpush1.msra.mxu0 0.0
    %721 = vmatprep.subr.mxu0 0.0
    %722 = vmatpush1.msra.mxu0 0.0
    %723 = vmatprep.subr.mxu0 0.0
    %724 = vmatpush1.msra.mxu0 0.0
    %725 = vmatprep.subr.mxu0 0.0
    %726 = vmatpush1.msra.mxu0 0.0
    %727 = vmatprep.subr.mxu0 0.0
    %728 = vmatpush1.msra.mxu0 0.0
    %729 = vmatprep.subr.mxu0 0.0
    %730 = vmatpush1.msra.mxu0 0.0
    %731 = vmatprep.subr.mxu0 0.0
    %732 = vmatpush1.msra.mxu0 0.0
    %733 = vmatprep.subr.mxu0 0.0
    %734 = vmatpush1.msra.mxu0 0.0
    %735 = vmatprep.subr.mxu0 0.0
    %736 = vmatpush1.msra.mxu0 0.0
    %737 = vmatprep.subr.mxu0 0.0
    %738 = vmatpush1.msra.mxu0 0.0
    %739 = vmatprep.subr.mxu0 0.0
    %740 = vmatpush1.msra.mxu0 0.0
    %741 = vmatprep.subr.mxu0 0.0
    %742 = vmatpush1.msra.mxu0 0.0
    %743 = vmatprep.subr.mxu0 0.0
    %744 = vmatpush1.msra.mxu0 0.0
    %745 = vmatprep.subr.mxu0 0.0
    %746 = vmatpush1.msra.mxu0 0.0
    %747 = vmatprep.subr.mxu0 0.0
    %748 = vmatpush1.msra.mxu0 0.0
    %749 = vmatprep.subr.mxu0 0.0
    %750 = vmatpush1.msra.mxu0 0.0
    %751 = vmatprep.subr.mxu0 0.0
    %752 = vmatpush1.msra.mxu0 0.0
    %753 = vmatprep.subr.mxu0 0.0
    %754 = vmatpush1.msra.mxu0 0.0
    %755 = vmatprep.subr.mxu0 0.0
    %756 = vmatpush1.msra.mxu0 0.0
    %757 = vmatprep.subr.mxu0 0.0
    %758 = vmatpush1.msra.mxu0 0.0
    %759 = vmatprep.subr.mxu0 0.0
    %760 = vmatpush1.msra.mxu0 0.0
    %761 = vmatprep.subr.mxu0 0.0
    %762 = vmatpush1.msra.mxu0 0.0
    %763 = vmatprep.subr.mxu0 0.0
    %764 = vmatpush1.msra.mxu0 0.0
    %765 = vmatprep.subr.mxu0 0.0
    %766 = vmatpush1.msra.mxu0 0.0
    %767 = vmatprep.subr.mxu0 0.0
    %768 = vmatpush1.msra.mxu0 0.0
    %769 = vmatprep.subr.mxu0 0.0
    %770 = vmatpush1.msra.mxu0 0.0
    %771 = vmatprep.subr.mxu0 0.0
    %772 = vmatpush1.msra.mxu0 0.0
    %773 = vmatprep.subr.mxu0 0.0
    %774 = vmatpush1.msra.mxu0 0.0
    %775 = vmatprep.subr.mxu0 0.0
    %776 = vmatpush1.msra.mxu0 0.0
    %777 = vmatprep.mubr.f32.mxu0 0.0
    %778 = vmatmul.mubr.f32.gmra.mrb[0].mxu0 %v699
    %v779 = vpop.f32.mrb[0].mxu0
    %v780 = vadd.f32 %v696, %v779
    %v781 = vpop.f32.mrb[0].mxu0
    %v782 = vadd.f32 %v696, %v781
    %783 = vdwg.mxu0
    %784 = vmatprep.subr.mxu0 %v711
    %785 = vmatpush1.msra.mxu0 %v708
    %786 = vmatprep.subr.mxu0 0.0
    %787 = vmatpush1.msra.mxu0 0.0
    %788 = vmatprep.subr.mxu0 0.0
    %789 = vmatpush1.msra.mxu0 0.0
    %790 = vmatprep.subr.mxu0 0.0
    %791 = vmatpush1.msra.mxu0 0.0
    %792 = vmatprep.subr.mxu0 0.0
    %793 = vmatpush1.msra.mxu0 0.0
    %794 = vmatprep.subr.mxu0 0.0
    %795 = vmatpush1.msra.mxu0 0.0
    %796 = vmatprep.subr.mxu0 0.0
    %797 = vmatpush1.msra.mxu0 0.0
    %798 = vmatprep.subr.mxu0 0.0
    %799 = vmatpush1.msra.mxu0 0.0
    %800 = vmatprep.subr.mxu0 0.0
    %801 = vmatpush1.msra.mxu0 0.0
    %802 = vmatprep.subr.mxu0 0.0
    %803 = vmatpush1.msra.mxu0 0.0
    %804 = vmatprep.subr.mxu0 0.0
    %805 = vmatpush1.msra.mxu0 0.0
    %806 = vmatprep.subr.mxu0 0.0
    %807 = vmatpush1.msra.mxu0 0.0
    %808 = vmatprep.subr.mxu0 0.0
    %809 = vmatpush1.msra.mxu0 0.0
    %810 = vmatprep.subr.mxu0 0.0
    %811 = vmatpush1.msra.mxu0 0.0
    %812 = vmatprep.subr.mxu0 0.0
    %813 = vmatpush1.msra.mxu0 0.0
    %814 = vmatprep.subr.mxu0 0.0
    %815 = vmatpush1.msra.mxu0 0.0
    %816 = vmatprep.subr.mxu0 0.0
    %817 = vmatpush1.msra.mxu0 0.0
    %818 = vmatprep.subr.mxu0 0.0
    %819 = vmatpush1.msra.mxu0 0.0
    %820 = vmatprep.subr.mxu0 0.0
    %821 = vmatpush1.msra.mxu0 0.0
    %822 = vmatprep.subr.mxu0 0.0
    %823 = vmatpush1.msra.mxu0 0.0
    %824 = vmatprep.subr.mxu0 0.0
    %825 = vmatpush1.msra.mxu0 0.0
    %826 = vmatprep.subr.mxu0 0.0
    %827 = vmatpush1.msra.mxu0 0.0
    %828 = vmatprep.subr.mxu0 0.0
    %829 = vmatpush1.msra.mxu0 0.0
    %830 = vmatprep.subr.mxu0 0.0
    %831 = vmatpush1.msra.mxu0 0.0
    %832 = vmatprep.subr.mxu0 0.0
    %833 = vmatpush1.msra.mxu0 0.0
    %834 = vmatprep.subr.mxu0 0.0
    %835 = vmatpush1.msra.mxu0 0.0
    %836 = vmatprep.subr.mxu0 0.0
    %837 = vmatpush1.msra.mxu0 0.0
    %838 = vmatprep.subr.mxu0 0.0
    %839 = vmatpush1.msra.mxu0 0.0
    %840 = vmatprep.subr.mxu0 0.0
    %841 = vmatpush1.msra.mxu0 0.0
    %842 = vmatprep.subr.mxu0 0.0
    %843 = vmatpush1.msra.mxu0 0.0
    %844 = vmatprep.subr.mxu0 0.0
    %845 = vmatpush1.msra.mxu0 0.0
    %846 = vmatprep.subr.mxu0 0.0
    %847 = vmatpush1.msra.mxu0 0.0
    %848 = vmatprep.mubr.f32.mxu0 0.0
    %849 = vmatmul.mubr.f32.gmra.mrb[0].mxu0 %v699
    %v850 = vpop.f32.mrb[0].mxu0
    %v851 = vadd.f32 %v696, %v850
    %v852 = vpop.f32.mrb[0].mxu0
    %v853 = vadd.f32 %v696, %v852
    %854 = vdwg.mxu0
    %v855 = vadd.f32 %v512, %v780
    %v856 = vadd.f32 %v513, %v782
    %v857 = vadd.f32 %v514, %v851
    %v858 = vadd.f32 %v515, %v853
    %v859 = vmul.f32 %v855, 0.5
    %v860 = vmul.f32 %v856, 0.5
    %v861 = vmul.f32 %v857, 0.5
    %v862 = vmul.f32 %v858, 0.5
    %vm863 = vcmp.ge.f32.partialorder %v859, 0.0
    %vm864 = vcmp.ge.f32.partialorder %v860, 0.0
    %vm865 = vcmp.ge.f32.partialorder %v861, 0.0
    %vm866 = vcmp.ge.f32.partialorder %v862, 0.0
    %867 = vset.pattern.permute.xlu0 5
    %868 = vperm.xlu0 %867, %v49
    %v869 = vpop.permute.xlu0 %868
    %v871 = vmul.f32 %v869, %v859
    %v872 = vmul.f32 %v869, %v860
    %v873 = vmul.f32 %v869, %v861
    %v874 = vmul.f32 %v869, %v862
    %v875 = vsel %vm863, %v859, %v871
    %v876 = vsel %vm864, %v860, %v872
    %v877 = vsel %vm865, %v861, %v873
    %v878 = vsel %vm866, %v862, %v874
    %v881 = vcombine.low %v875, %v876
    %883 = vst [vmem:[#allocation7] sm:$0xff] %v881
    %v884 = vcombine.low %v512, %v513
    %886 = vst [vmem:[#allocation8] sm:$0xff] %v884
    %v889 = vcombine.low %v877, %v878
    %s891 = scalar_lea.vmem [#allocation7], 8
    %892 = vst [vmem:[%s891] sm:$0xff] %v889
    %v893 = vcombine.low %v514, %v515
    %s895 = scalar_lea.vmem [#allocation8], 8
    %896 = vst [vmem:[%s895] sm:$0xff] %v893
    // Predicated region
    $region22: #{tpu_custom_call.1} parent=1 // pred_check
      _
    $region23: #{tpu_custom_call.1} parent=1 // pred_check_branch
      %898 = sbr.rel (0) target = $region25
    $region24: #{tpu_custom_call.1} parent=1 // pred_region
      %s900 = ssub.s32 256, 256
      %901 = vsyncadd [#allocation4], %s900
      %s902 = sshll.u32 [#allocation7], 4
      %s903 = int_to_ptr.vmem [resolvable:$true] %s902
      %908 = dma.vmem_to_hbm [thread:$0]  %s903, 256, %s3, [#allocation4], 128, 128, 8
    $region25: #{tpu_custom_call.1} parent=1 // pred_fallthru
      _
    // Predicated region
    $region26: #{tpu_custom_call.1} parent=1 // pred_check
      _
    $region27: #{tpu_custom_call.1} parent=1 // pred_check_branch
      %910 = sbr.rel (0) target = $region29
    $region28: #{tpu_custom_call.1} parent=1 // pred_region
      %s912 = ssub.s32 256, 256
      %913 = vsyncadd [#allocation9], %s912
      %s914 = sshll.u32 [#allocation8], 4
      %s915 = int_to_ptr.vmem [resolvable:$true] %s914
      %920 = dma.vmem_to_hbm [thread:$0]  %s915, 256, %s4, [#allocation9], 128, 128, 8
    $region29: #{tpu_custom_call.1} parent=1 // pred_fallthru
      _
    // Predicated region
    $region30: #{tpu_custom_call.1} parent=1 // pred_check
      _
    $region31: #{tpu_custom_call.1} parent=1 // pred_check_branch
      %922 = sbr.rel (0) target = $region33
    $region32: #{tpu_custom_call.1} parent=1 // pred_region
      %923 = dma.done [#allocation4], 256
    $region33: #{tpu_custom_call.1} parent=1 // pred_fallthru
      _
    // Predicated region
    $region34: #{tpu_custom_call.1} parent=1 // pred_check
      _
    $region35: #{tpu_custom_call.1} parent=1 // pred_check_branch
      %925 = sbr.rel (0) target = $region37
    $region36: #{tpu_custom_call.1} parent=1 // pred_region
      %926 = dma.done [#allocation9], 256
    $region37: #{tpu_custom_call.1} parent=1 // pred_fallthru
      _
    %927 = vsyncpa [#allocation3], 1
    %928 = vsyncpa [#allocation6], 1
    %929 = vsyncpa [#allocation4], 1
    %930 = vsyncpa [#allocation9], 1

</llo_original>
